<compile_context>
chip_gen: v6e
topology: v6e:2x2x1
jax: 0.10.0
libtpu: 0.0.40
codegen_flags: <defaults>
</compile_context>

<pallas_src>
import jax
import jax.numpy as jnp
from jax.experimental import pallas as pl
from jax.experimental.pallas import tpu as pltpu

IN_FEATURES = 256
OUT_FEATURES = 1024


def linear_kernel(x_ref, w_ref, b_ref, o_ref):
    # x_ref: (B, 256) f32    w_ref: (256, 1024) bf16
    # b_ref: (1, 1024) f32   o_ref: (B, 1024) f32
    x_bf16 = x_ref[...].astype(jnp.bfloat16)  # in-kernel cast, hidden under weight DMA
    acc = jnp.dot(x_bf16, w_ref[...], preferred_element_type=jnp.float32)
    o_ref[...] = (acc + b_ref[...]).astype(o_ref.dtype)  # f32 epilogue (v5e-safe)


def linear_pallas(x, w_t_bf16, b):
    """y = x @ w_t + b as one VMEM-resident block (no grid).

    x:        (B, 256) f32
    w_t_bf16: (256, 1024) bf16  -- stored bf16 at init, no per-call cast
    b:        (1024,) f32
    """
    B, K = x.shape
    K2, N = w_t_bf16.shape
    assert K == K2
    assert w_t_bf16.dtype == jnp.bfloat16
    b2d = b.astype(jnp.float32).reshape(1, N)

    # Bytes that actually cross HBM for this call.
    cost = pl.CostEstimate(
        flops=2 * B * K * N,
        transcendentals=0,
        bytes_accessed=B * K * 4 + K * N * 2 + N * 4 + B * N * 4,
    )

    return pl.pallas_call(
        linear_kernel,
        out_shape=jax.ShapeDtypeStruct((B, N), jnp.float32),
        in_specs=[
            pl.BlockSpec((B, K), lambda: (0, 0)),   # x: whole activation (f32)
            pl.BlockSpec((K, N), lambda: (0, 0)),   # w_t: whole weight (bf16)
            pl.BlockSpec((1, N), lambda: (0, 0)),   # bias: whole, resident (f32)
        ],
        out_specs=pl.BlockSpec((B, N), lambda: (0, 0)),
        cost_estimate=cost,
    )(x, w_t_bf16, b2d)


def init_params(key):
    """Deterministic init mimicking PyTorch Linear default U(-1/sqrt(fan_in), +).

    The weight is stored transposed (in, out) and in bf16 so no per-call cast
    is needed (perf review item 1).
    """
    kw, kb = jax.random.split(key)
    bound = 1.0 / (IN_FEATURES ** 0.5)
    # PyTorch stores weight as (out, in); we keep the transposed (in, out) copy.
    w = jax.random.uniform(kw, (OUT_FEATURES, IN_FEATURES), jnp.float32,
                           minval=-bound, maxval=bound)
    b = jax.random.uniform(kb, (OUT_FEATURES,), jnp.float32,
                           minval=-bound, maxval=bound)
    return w.T.astype(jnp.bfloat16), b  # (256, 1024) bf16, (1024,) f32


if __name__ == "__main__":
    key = jax.random.PRNGKey(0)
    k_x, k_p = jax.random.split(key)

    B = 8  # small batch
    x = jax.random.normal(k_x, (B, IN_FEATURES), jnp.float32)
    w_t_bf16, b = init_params(k_p)

    y = linear_pallas(x, w_t_bf16, b)
    jax.block_until_ready(y)
    assert y.shape == (B, OUT_FEATURES)
    assert y.dtype == jnp.float32

    # Reference 1: same mixed-precision math (bf16 operands, f32 accumulate).
    y_ref_bf16 = jnp.dot(x.astype(jnp.bfloat16), w_t_bf16,
                         preferred_element_type=jnp.float32) + b[None, :]
    assert jnp.allclose(y, y_ref_bf16, atol=1e-4, rtol=1e-4)

    # Reference 2: f32 nn.Linear semantics using the (bf16-stored) effective
    # weight; loose tolerance covers the activation bf16 cast.
    y_ref_f32 = x @ w_t_bf16.astype(jnp.float32) + b[None, :]
    assert jnp.allclose(y, y_ref_f32, atol=2e-2, rtol=2e-2)

    print("KERNEL_OK")
</pallas_src>

<mosaic_0001>
module attributes {stable_mosaic.version = 11 : i64} {
  func.func @linear_kernel(%arg0: memref<8x256xf32, #tpu.memory_space<vmem>>, %arg1: memref<256x1024xbf16, #tpu.memory_space<vmem>>, %arg2: memref<1x1024xf32, #tpu.memory_space<vmem>>, %arg3: memref<8x1024xf32, #tpu.memory_space<vmem>>) attributes {dimension_semantics = [], scalar_prefetch = 0 : i64, scratch_operands = 0 : i64, tpu.core_type = #tpu.core_type<tc>} {
    %c0 = arith.constant 0 : index
    %c0_0 = arith.constant 0 : index
    %0 = vector.load %arg0[%c0, %c0_0] : memref<8x256xf32, #tpu.memory_space<vmem>>, vector<8x256xf32>
    %1 = arith.truncf %0 : vector<8x256xf32> to vector<8x256xbf16>
    %c0_1 = arith.constant 0 : index
    %c0_2 = arith.constant 0 : index
    %2 = vector.load %arg1[%c0_1, %c0_2] : memref<256x1024xbf16, #tpu.memory_space<vmem>>, vector<256x1024xbf16>
    %cst = arith.constant dense<0.000000e+00> : vector<8x1024xf32>
    %3 = tpu.matmul %1, %2, %cst {dimension_numbers = #tpu.dot_dimension_numbers<[1], [0], [0], [1], [0, 0, 1, 1], [], []>} : vector<8x256xbf16>, vector<256x1024xbf16>, vector<8x1024xf32> -> vector<8x1024xf32>
    %c0_3 = arith.constant 0 : index
    %c0_4 = arith.constant 0 : index
    %4 = vector.load %arg2[%c0_3, %c0_4] : memref<1x1024xf32, #tpu.memory_space<vmem>>, vector<1x1024xf32>
    %5 = vector.broadcast %4 : vector<1x1024xf32> to vector<8x1024xf32>
    %6 = arith.addf %3, %5 : vector<8x1024xf32>
    %c0_5 = arith.constant 0 : index
    %c0_6 = arith.constant 0 : index
    %7 = vector.load %arg3[%c0_5, %c0_6] : memref<8x1024xf32, #tpu.memory_space<vmem>>, vector<8x1024xf32>
    tpu.vector_store %arg3[%c0_5, %c0_6], %6 {strides = array<i32>} : memref<8x1024xf32, #tpu.memory_space<vmem>>, vector<8x1024xf32>,
    return
  }
}

</mosaic_0001>

<llo_original>
// kernel: tpu_custom_call.1
$region0: #{tpu_custom_call.1}
  #allocation0 [shape = 'u32[]', space=smem, size = 0x4, offset = 0x4, fixed_abs, tag = 'smem constant byte address 0x4 - core index']
  #allocation1 [shape = 'u32[144,128]{1,0:T(1,128)}', space=vmem, size = 0x12000, scoped, tag = 'internal scratch']
  %s0 = inlined_call_operand.hbm [shape: f32[8,256], index: 0, kind: input, shape index: {}]
  %s1 = inlined_call_operand.hbm [shape: bf16[256,1024], index: 1, kind: input, shape index: {}]
  %s2 = inlined_call_operand.hbm [shape: f32[1,1024], index: 2, kind: input, shape index: {}]
  %s3 = inlined_call_operand.hbm [shape: f32[8,1024], index: 3, kind: output, shape index: {}]
  %s4 = sld [smem:[#allocation0]]
  $region34: #{tpu_custom_call.1} parent=0
    _
  %s6 = ssub.s32 1, %s4
  %s7 = scalar_select 0, %s6, %s4
  $region1: #{tpu_custom_call.1} parent=0
    #allocation2 [shape = 'u8[8192]{0}', space=vmem, size = 0x2000, scoped, tag = 'input window, operand 0, single buffered']
    #allocation3 [shape = 's32[1]{0}', space=sflag, size = 0x4, scoped, tag = 'scoped memory for tpu_custom_call.1']
    #allocation4 [shape = 's32[1]{0}', space=sflag, size = 0x4, scoped, tag = 'scoped memory for tpu_custom_call.1']
    #allocation5 [shape = 'u8[524288]{0}', space=vmem, size = 0x80000, scoped, tag = 'input window, operand 1, single buffered']
    #allocation6 [shape = 's32[1]{0}', space=sflag, size = 0x4, scoped, tag = 'scoped memory for tpu_custom_call.1']
    #allocation7 [shape = 'u8[4096]{0}', space=vmem, size = 0x1000, scoped, tag = 'input window, operand 2, single buffered']
    #allocation8 [shape = 'u8[32768]{0}', space=vmem, size = 0x8000, scoped, tag = 'output window, operand 0, single buffered']
    %8 = vsyncpa [#allocation3], 0
    %9 = vsyncpa [#allocation6], 0
    %10 = vsyncpa [#allocation4], 0
    // Predicated region
    $region2: #{tpu_custom_call.1} parent=1 // pred_check
      _
    $region3: #{tpu_custom_call.1} parent=1 // pred_check_branch
      %12 = sbr.rel (0) target = $region5
    $region4: #{tpu_custom_call.1} parent=1 // pred_region
      %s14 = ssub.s32 256, 256
      %15 = vsyncadd [#allocation3], %s14
      %s17 = sshll.u32 [#allocation2], 4
      %s18 = int_to_ptr.vmem [resolvable:$true] %s17
      %20 = dma.hbm_to_vmem [thread:$0]  %s0, 256, %s18, [#allocation3]
    $region5: #{tpu_custom_call.1} parent=1 // pred_fallthru
      _
    // Predicated region
    $region6: #{tpu_custom_call.1} parent=1 // pred_check
      _
    $region7: #{tpu_custom_call.1} parent=1 // pred_check_branch
      %22 = sbr.rel (0) target = $region9
    $region8: #{tpu_custom_call.1} parent=1 // pred_region
      %s24 = ssub.s32 16384, 16384
      %25 = vsyncadd [#allocation6], %s24
      %s26 = sshll.u32 [#allocation5], 4
      %s27 = int_to_ptr.vmem [resolvable:$true] %s26
      %32 = dma.hbm_to_vmem [thread:$0]  %s1, 16384, %s27, [#allocation6], 512, 512, 32
    $region9: #{tpu_custom_call.1} parent=1 // pred_fallthru
      _
    // Predicated region
    $region10: #{tpu_custom_call.1} parent=1 // pred_check
      _
    $region11: #{tpu_custom_call.1} parent=1 // pred_check_branch
      %34 = sbr.rel (0) target = $region13
    $region12: #{tpu_custom_call.1} parent=1 // pred_region
      %s36 = ssub.s32 128, 128
      %37 = vsyncadd [#allocation6], %s36
      %s39 = sshll.u32 [#allocation7], 4
      %s40 = int_to_ptr.vmem [resolvable:$true] %s39
      %42 = dma.hbm_to_vmem [thread:$0]  %s2, 128, %s40, [#allocation6]
    $region13: #{tpu_custom_call.1} parent=1 // pred_fallthru
      _
    // Predicated region
    $region14: #{tpu_custom_call.1} parent=1 // pred_check
      _
    $region15: #{tpu_custom_call.1} parent=1 // pred_check_branch
      %44 = sbr.rel (0) target = $region17
    $region16: #{tpu_custom_call.1} parent=1 // pred_region
      %45 = dma.done [#allocation3], 256
    $region17: #{tpu_custom_call.1} parent=1 // pred_fallthru
      _
    // Predicated region
    $region18: #{tpu_custom_call.1} parent=1 // pred_check
      _
    $region19: #{tpu_custom_call.1} parent=1 // pred_check_branch
      %47 = sbr.rel (0) target = $region21
    $region20: #{tpu_custom_call.1} parent=1 // pred_region
      %48 = dma.done [#allocation6], 16384
    $region21: #{tpu_custom_call.1} parent=1 // pred_fallthru
      _
    // Predicated region
    $region22: #{tpu_custom_call.1} parent=1 // pred_check
      _
    $region23: #{tpu_custom_call.1} parent=1 // pred_check_branch
      %50 = sbr.rel (0) target = $region25
    $region24: #{tpu_custom_call.1} parent=1 // pred_region
      %51 = dma.done [#allocation6], 128
    $region25: #{tpu_custom_call.1} parent=1 // pred_fallthru
      _
    %v52 = vld [vmem:[#allocation2] sm:$0xff]
    %v53 = vld [vmem:[#allocation2 + $0x8] sm:$0xff]
    %v54 = vpack.c.bf16 %v52, %v52
    %v55 = vpack.c.bf16 %v53, %v53
    %v56 = vld [vmem:[#allocation5] sm:$0xff]
    %v57 = vld [vmem:[#allocation5 + $0x8] sm:$0xff]
    %v58 = vld [vmem:[#allocation5 + $0x10] sm:$0xff]
    %v59 = vld [vmem:[#allocation5 + $0x18] sm:$0xff]
    %v60 = vld [vmem:[#allocation5 + $0x20] sm:$0xff]
    %v61 = vld [vmem:[#allocation5 + $0x28] sm:$0xff]
    %v62 = vld [vmem:[#allocation5 + $0x30] sm:$0xff]
    %v63 = vld [vmem:[#allocation5 + $0x38] sm:$0xff]
    %v64 = vld [vmem:[#allocation5 + $0x40] sm:$0xff]
    %v65 = vld [vmem:[#allocation5 + $0x48] sm:$0xff]
    %v66 = vld [vmem:[#allocation5 + $0x50] sm:$0xff]
    %v67 = vld [vmem:[#allocation5 + $0x58] sm:$0xff]
    %v68 = vld [vmem:[#allocation5 + $0x60] sm:$0xff]
    %v69 = vld [vmem:[#allocation5 + $0x68] sm:$0xff]
    %v70 = vld [vmem:[#allocation5 + $0x70] sm:$0xff]
    %v71 = vld [vmem:[#allocation5 + $0x78] sm:$0xff]
    %v72 = vld [vmem:[#allocation5 + $0x80] sm:$0xff]
    %v73 = vld [vmem:[#allocation5 + $0x88] sm:$0xff]
    %v74 = vld [vmem:[#allocation5 + $0x90] sm:$0xff]
    %v75 = vld [vmem:[#allocation5 + $0x98] sm:$0xff]
    %v76 = vld [vmem:[#allocation5 + $0xa0] sm:$0xff]
    %v77 = vld [vmem:[#allocation5 + $0xa8] sm:$0xff]
    %v78 = vld [vmem:[#allocation5 + $0xb0] sm:$0xff]
    %v79 = vld [vmem:[#allocation5 + $0xb8] sm:$0xff]
    %v80 = vld [vmem:[#allocation5 + $0xc0] sm:$0xff]
    %v81 = vld [vmem:[#allocation5 + $0xc8] sm:$0xff]
    %v82 = vld [vmem:[#allocation5 + $0xd0] sm:$0xff]
    %v83 = vld [vmem:[#allocation5 + $0xd8] sm:$0xff]
    %v84 = vld [vmem:[#allocation5 + $0xe0] sm:$0xff]
    %v85 = vld [vmem:[#allocation5 + $0xe8] sm:$0xff]
    %v86 = vld [vmem:[#allocation5 + $0xf0] sm:$0xff]
    %v87 = vld [vmem:[#allocation5 + $0xf8] sm:$0xff]
    %v88 = vld [vmem:[#allocation5 + $0x100] sm:$0xff]
    %v89 = vld [vmem:[#allocation5 + $0x108] sm:$0xff]
    %v90 = vld [vmem:[#allocation5 + $0x110] sm:$0xff]
    %v91 = vld [vmem:[#allocation5 + $0x118] sm:$0xff]
    %v92 = vld [vmem:[#allocation5 + $0x120] sm:$0xff]
    %v93 = vld [vmem:[#allocation5 + $0x128] sm:$0xff]
    %v94 = vld [vmem:[#allocation5 + $0x130] sm:$0xff]
    %v95 = vld [vmem:[#allocation5 + $0x138] sm:$0xff]
    %v96 = vld [vmem:[#allocation5 + $0x140] sm:$0xff]
    %v97 = vld [vmem:[#allocation5 + $0x148] sm:$0xff]
    %v98 = vld [vmem:[#allocation5 + $0x150] sm:$0xff]
    %v99 = vld [vmem:[#allocation5 + $0x158] sm:$0xff]
    %v100 = vld [vmem:[#allocation5 + $0x160] sm:$0xff]
    %v101 = vld [vmem:[#allocation5 + $0x168] sm:$0xff]
    %v102 = vld [vmem:[#allocation5 + $0x170] sm:$0xff]
    %v103 = vld [vmem:[#allocation5 + $0x178] sm:$0xff]
    %v104 = vld [vmem:[#allocation5 + $0x180] sm:$0xff]
    %v105 = vld [vmem:[#allocation5 + $0x188] sm:$0xff]
    %v106 = vld [vmem:[#allocation5 + $0x190] sm:$0xff]
    %v107 = vld [vmem:[#allocation5 + $0x198] sm:$0xff]
    %v108 = vld [vmem:[#allocation5 + $0x1a0] sm:$0xff]
    %v109 = vld [vmem:[#allocation5 + $0x1a8] sm:$0xff]
    %v110 = vld [vmem:[#allocation5 + $0x1b0] sm:$0xff]
    %v111 = vld [vmem:[#allocation5 + $0x1b8] sm:$0xff]
    %v112 = vld [vmem:[#allocation5 + $0x1c0] sm:$0xff]
    %v113 = vld [vmem:[#allocation5 + $0x1c8] sm:$0xff]
    %v114 = vld [vmem:[#allocation5 + $0x1d0] sm:$0xff]
    %v115 = vld [vmem:[#allocation5 + $0x1d8] sm:$0xff]
    %v116 = vld [vmem:[#allocation5 + $0x1e0] sm:$0xff]
    %v117 = vld [vmem:[#allocation5 + $0x1e8] sm:$0xff]
    %v118 = vld [vmem:[#allocation5 + $0x1f0] sm:$0xff]
    %v119 = vld [vmem:[#allocation5 + $0x1f8] sm:$0xff]
    %v120 = vld [vmem:[#allocation5 + $0x200] sm:$0xff]
    %v121 = vld [vmem:[#allocation5 + $0x208] sm:$0xff]
    %v122 = vld [vmem:[#allocation5 + $0x210] sm:$0xff]
    %v123 = vld [vmem:[#allocation5 + $0x218] sm:$0xff]
    %v124 = vld [vmem:[#allocation5 + $0x220] sm:$0xff]
    %v125 = vld [vmem:[#allocation5 + $0x228] sm:$0xff]
    %v126 = vld [vmem:[#allocation5 + $0x230] sm:$0xff]
    %v127 = vld [vmem:[#allocation5 + $0x238] sm:$0xff]
    %v128 = vld [vmem:[#allocation5 + $0x240] sm:$0xff]
    %v129 = vld [vmem:[#allocation5 + $0x248] sm:$0xff]
    %v130 = vld [vmem:[#allocation5 + $0x250] sm:$0xff]
    %v131 = vld [vmem:[#allocation5 + $0x258] sm:$0xff]
    %v132 = vld [vmem:[#allocation5 + $0x260] sm:$0xff]
    %v133 = vld [vmem:[#allocation5 + $0x268] sm:$0xff]
    %v134 = vld [vmem:[#allocation5 + $0x270] sm:$0xff]
    %v135 = vld [vmem:[#allocation5 + $0x278] sm:$0xff]
    %v136 = vld [vmem:[#allocation5 + $0x280] sm:$0xff]
    %v137 = vld [vmem:[#allocation5 + $0x288] sm:$0xff]
    %v138 = vld [vmem:[#allocation5 + $0x290] sm:$0xff]
    %v139 = vld [vmem:[#allocation5 + $0x298] sm:$0xff]
    %v140 = vld [vmem:[#allocation5 + $0x2a0] sm:$0xff]
    %v141 = vld [vmem:[#allocation5 + $0x2a8] sm:$0xff]
    %v142 = vld [vmem:[#allocation5 + $0x2b0] sm:$0xff]
    %v143 = vld [vmem:[#allocation5 + $0x2b8] sm:$0xff]
    %v144 = vld [vmem:[#allocation5 + $0x2c0] sm:$0xff]
    %v145 = vld [vmem:[#allocation5 + $0x2c8] sm:$0xff]
    %v146 = vld [vmem:[#allocation5 + $0x2d0] sm:$0xff]
    %v147 = vld [vmem:[#allocation5 + $0x2d8] sm:$0xff]
    %v148 = vld [vmem:[#allocation5 + $0x2e0] sm:$0xff]
    %v149 = vld [vmem:[#allocation5 + $0x2e8] sm:$0xff]
    %v150 = vld [vmem:[#allocation5 + $0x2f0] sm:$0xff]
    %v151 = vld [vmem:[#allocation5 + $0x2f8] sm:$0xff]
    %v152 = vld [vmem:[#allocation5 + $0x300] sm:$0xff]
    %v153 = vld [vmem:[#allocation5 + $0x308] sm:$0xff]
    %v154 = vld [vmem:[#allocation5 + $0x310] sm:$0xff]
    %v155 = vld [vmem:[#allocation5 + $0x318] sm:$0xff]
    %v156 = vld [vmem:[#allocation5 + $0x320] sm:$0xff]
    %v157 = vld [vmem:[#allocation5 + $0x328] sm:$0xff]
    %v158 = vld [vmem:[#allocation5 + $0x330] sm:$0xff]
    %v159 = vld [vmem:[#allocation5 + $0x338] sm:$0xff]
    %v160 = vld [vmem:[#allocation5 + $0x340] sm:$0xff]
    %v161 = vld [vmem:[#allocation5 + $0x348] sm:$0xff]
    %v162 = vld [vmem:[#allocation5 + $0x350] sm:$0xff]
    %v163 = vld [vmem:[#allocation5 + $0x358] sm:$0xff]
    %v164 = vld [vmem:[#allocation5 + $0x360] sm:$0xff]
    %v165 = vld [vmem:[#allocation5 + $0x368] sm:$0xff]
    %v166 = vld [vmem:[#allocation5 + $0x370] sm:$0xff]
    %v167 = vld [vmem:[#allocation5 + $0x378] sm:$0xff]
    %v168 = vld [vmem:[#allocation5 + $0x380] sm:$0xff]
    %v169 = vld [vmem:[#allocation5 + $0x388] sm:$0xff]
    %v170 = vld [vmem:[#allocation5 + $0x390] sm:$0xff]
    %v171 = vld [vmem:[#allocation5 + $0x398] sm:$0xff]
    %v172 = vld [vmem:[#allocation5 + $0x3a0] sm:$0xff]
    %v173 = vld [vmem:[#allocation5 + $0x3a8] sm:$0xff]
    %v174 = vld [vmem:[#allocation5 + $0x3b0] sm:$0xff]
    %v175 = vld [vmem:[#allocation5 + $0x3b8] sm:$0xff]
    %v176 = vld [vmem:[#allocation5 + $0x3c0] sm:$0xff]
    %v177 = vld [vmem:[#allocation5 + $0x3c8] sm:$0xff]
    %v178 = vld [vmem:[#allocation5 + $0x3d0] sm:$0xff]
    %v179 = vld [vmem:[#allocation5 + $0x3d8] sm:$0xff]
    %v180 = vld [vmem:[#allocation5 + $0x3e0] sm:$0xff]
    %v181 = vld [vmem:[#allocation5 + $0x3e8] sm:$0xff]
    %v182 = vld [vmem:[#allocation5 + $0x3f0] sm:$0xff]
    %v183 = vld [vmem:[#allocation5 + $0x3f8] sm:$0xff]
    %v184 = vld [vmem:[#allocation7] sm:$0xff]
    %v186 = vlaneseq
    %v187 = vshrl.u32 %v186, 7
    %v188 = vsub.s32 0, %v187
    %v189 = vrot.slane %v184, %v188
    %v190 = vlaneseq
    %v191 = vshrl.u32 %v190, 7
    %v192 = vsub.s32 1, %v191
    %v193 = vrot.slane %v184, %v192
    %v194 = vlaneseq
    %v195 = vshrl.u32 %v194, 7
    %v196 = vsub.s32 2, %v195
    %v197 = vrot.slane %v184, %v196
    %v198 = vlaneseq
    %v199 = vshrl.u32 %v198, 7
    %v200 = vsub.s32 3, %v199
    %v201 = vrot.slane %v184, %v200
    %v202 = vlaneseq
    %v203 = vshrl.u32 %v202, 7
    %v204 = vsub.s32 4, %v203
    %v205 = vrot.slane %v184, %v204
    %v206 = vlaneseq
    %v207 = vshrl.u32 %v206, 7
    %v208 = vsub.s32 5, %v207
    %v209 = vrot.slane %v184, %v208
    %v210 = vlaneseq
    %v211 = vshrl.u32 %v210, 7
    %v212 = vsub.s32 6, %v211
    %v213 = vrot.slane %v184, %v212
    %v214 = vlaneseq
    %v215 = vshrl.u32 %v214, 7
    %v216 = vsub.s32 7, %v215
    %v217 = vrot.slane %v184, %v216
    %v354 = vunpack.c.l.b16 %v56
    %v355 = vunpack.c.h.b16 %v56
    %v356 = vunpack.c.l.b16 %v57
    %v357 = vunpack.c.h.b16 %v57
    %v358 = vunpack.c.l.b16 %v58
    %v359 = vunpack.c.h.b16 %v58
    %v360 = vunpack.c.l.b16 %v59
    %v361 = vunpack.c.h.b16 %v59
    %v362 = vunpack.c.l.b16 %v60
    %v363 = vunpack.c.h.b16 %v60
    %v364 = vunpack.c.l.b16 %v61
    %v365 = vunpack.c.h.b16 %v61
    %v366 = vunpack.c.l.b16 %v62
    %v367 = vunpack.c.h.b16 %v62
    %v368 = vunpack.c.l.b16 %v63
    %v369 = vunpack.c.h.b16 %v63
    %v370 = vunpack.c.l.b16 %v64
    %v371 = vunpack.c.h.b16 %v64
    %v372 = vunpack.c.l.b16 %v65
    %v373 = vunpack.c.h.b16 %v65
    %v374 = vunpack.c.l.b16 %v66
    %v375 = vunpack.c.h.b16 %v66
    %v376 = vunpack.c.l.b16 %v67
    %v377 = vunpack.c.h.b16 %v67
    %v378 = vunpack.c.l.b16 %v68
    %v379 = vunpack.c.h.b16 %v68
    %v380 = vunpack.c.l.b16 %v69
    %v381 = vunpack.c.h.b16 %v69
    %v382 = vunpack.c.l.b16 %v70
    %v383 = vunpack.c.h.b16 %v70
    %v384 = vunpack.c.l.b16 %v71
    %v385 = vunpack.c.h.b16 %v71
    %v386 = vunpack.c.l.b16 %v72
    %v387 = vunpack.c.h.b16 %v72
    %v388 = vunpack.c.l.b16 %v73
    %v389 = vunpack.c.h.b16 %v73
    %v390 = vunpack.c.l.b16 %v74
    %v391 = vunpack.c.h.b16 %v74
    %v392 = vunpack.c.l.b16 %v75
    %v393 = vunpack.c.h.b16 %v75
    %v394 = vunpack.c.l.b16 %v76
    %v395 = vunpack.c.h.b16 %v76
    %v396 = vunpack.c.l.b16 %v77
    %v397 = vunpack.c.h.b16 %v77
    %v398 = vunpack.c.l.b16 %v78
    %v399 = vunpack.c.h.b16 %v78
    %v400 = vunpack.c.l.b16 %v79
    %v401 = vunpack.c.h.b16 %v79
    %v402 = vunpack.c.l.b16 %v80
    %v403 = vunpack.c.h.b16 %v80
    %v404 = vunpack.c.l.b16 %v81
    %v405 = vunpack.c.h.b16 %v81
    %v406 = vunpack.c.l.b16 %v82
    %v407 = vunpack.c.h.b16 %v82
    %v408 = vunpack.c.l.b16 %v83
    %v409 = vunpack.c.h.b16 %v83
    %v410 = vunpack.c.l.b16 %v84
    %v411 = vunpack.c.h.b16 %v84
    %v412 = vunpack.c.l.b16 %v85
    %v413 = vunpack.c.h.b16 %v85
    %v414 = vunpack.c.l.b16 %v86
    %v415 = vunpack.c.h.b16 %v86
    %v416 = vunpack.c.l.b16 %v87
    %v417 = vunpack.c.h.b16 %v87
    %v418 = vunpack.c.l.b16 %v88
    %v419 = vunpack.c.h.b16 %v88
    %v420 = vunpack.c.l.b16 %v89
    %v421 = vunpack.c.h.b16 %v89
    %v422 = vunpack.c.l.b16 %v90
    %v423 = vunpack.c.h.b16 %v90
    %v424 = vunpack.c.l.b16 %v91
    %v425 = vunpack.c.h.b16 %v91
    %v426 = vunpack.c.l.b16 %v92
    %v427 = vunpack.c.h.b16 %v92
    %v428 = vunpack.c.l.b16 %v93
    %v429 = vunpack.c.h.b16 %v93
    %v430 = vunpack.c.l.b16 %v94
    %v431 = vunpack.c.h.b16 %v94
    %v432 = vunpack.c.l.b16 %v95
    %v433 = vunpack.c.h.b16 %v95
    %v434 = vunpack.c.l.b16 %v96
    %v435 = vunpack.c.h.b16 %v96
    %v436 = vunpack.c.l.b16 %v97
    %v437 = vunpack.c.h.b16 %v97
    %v438 = vunpack.c.l.b16 %v98
    %v439 = vunpack.c.h.b16 %v98
    %v440 = vunpack.c.l.b16 %v99
    %v441 = vunpack.c.h.b16 %v99
    %v442 = vunpack.c.l.b16 %v100
    %v443 = vunpack.c.h.b16 %v100
    %v444 = vunpack.c.l.b16 %v101
    %v445 = vunpack.c.h.b16 %v101
    %v446 = vunpack.c.l.b16 %v102
    %v447 = vunpack.c.h.b16 %v102
    %v448 = vunpack.c.l.b16 %v103
    %v449 = vunpack.c.h.b16 %v103
    %v450 = vunpack.c.l.b16 %v104
    %v451 = vunpack.c.h.b16 %v104
    %v452 = vunpack.c.l.b16 %v105
    %v453 = vunpack.c.h.b16 %v105
    %v454 = vunpack.c.l.b16 %v106
    %v455 = vunpack.c.h.b16 %v106
    %v456 = vunpack.c.l.b16 %v107
    %v457 = vunpack.c.h.b16 %v107
    %v458 = vunpack.c.l.b16 %v108
    %v459 = vunpack.c.h.b16 %v108
    %v460 = vunpack.c.l.b16 %v109
    %v461 = vunpack.c.h.b16 %v109
    %v462 = vunpack.c.l.b16 %v110
    %v463 = vunpack.c.h.b16 %v110
    %v464 = vunpack.c.l.b16 %v111
    %v465 = vunpack.c.h.b16 %v111
    %v466 = vunpack.c.l.b16 %v112
    %v467 = vunpack.c.h.b16 %v112
    %v468 = vunpack.c.l.b16 %v113
    %v469 = vunpack.c.h.b16 %v113
    %v470 = vunpack.c.l.b16 %v114
    %v471 = vunpack.c.h.b16 %v114
    %v472 = vunpack.c.l.b16 %v115
    %v473 = vunpack.c.h.b16 %v115
    %v474 = vunpack.c.l.b16 %v116
    %v475 = vunpack.c.h.b16 %v116
    %v476 = vunpack.c.l.b16 %v117
    %v477 = vunpack.c.h.b16 %v117
    %v478 = vunpack.c.l.b16 %v118
    %v479 = vunpack.c.h.b16 %v118
    %v480 = vunpack.c.l.b16 %v119
    %v481 = vunpack.c.h.b16 %v119
    %v482 = vunpack.c.l.b16 %v120
    %v483 = vunpack.c.h.b16 %v120
    %v484 = vunpack.c.l.b16 %v121
    %v485 = vunpack.c.h.b16 %v121
    %v486 = vunpack.c.l.b16 %v122
    %v487 = vunpack.c.h.b16 %v122
    %v488 = vunpack.c.l.b16 %v123
    %v489 = vunpack.c.h.b16 %v123
    %v490 = vunpack.c.l.b16 %v124
    %v491 = vunpack.c.h.b16 %v124
    %v492 = vunpack.c.l.b16 %v125
    %v493 = vunpack.c.h.b16 %v125
    %v494 = vunpack.c.l.b16 %v126
    %v495 = vunpack.c.h.b16 %v126
    %v496 = vunpack.c.l.b16 %v127
    %v497 = vunpack.c.h.b16 %v127
    %v498 = vunpack.c.l.b16 %v128
    %v499 = vunpack.c.h.b16 %v128
    %v500 = vunpack.c.l.b16 %v129
    %v501 = vunpack.c.h.b16 %v129
    %v502 = vunpack.c.l.b16 %v130
    %v503 = vunpack.c.h.b16 %v130
    %v504 = vunpack.c.l.b16 %v131
    %v505 = vunpack.c.h.b16 %v131
    %v506 = vunpack.c.l.b16 %v132
    %v507 = vunpack.c.h.b16 %v132
    %v508 = vunpack.c.l.b16 %v133
    %v509 = vunpack.c.h.b16 %v133
    %v510 = vunpack.c.l.b16 %v134
    %v511 = vunpack.c.h.b16 %v134
    %v512 = vunpack.c.l.b16 %v135
    %v513 = vunpack.c.h.b16 %v135
    %v514 = vunpack.c.l.b16 %v136
    %v515 = vunpack.c.h.b16 %v136
    %v516 = vunpack.c.l.b16 %v137
    %v517 = vunpack.c.h.b16 %v137
    %v518 = vunpack.c.l.b16 %v138
    %v519 = vunpack.c.h.b16 %v138
    %v520 = vunpack.c.l.b16 %v139
    %v521 = vunpack.c.h.b16 %v139
    %v522 = vunpack.c.l.b16 %v140
    %v523 = vunpack.c.h.b16 %v140
    %v524 = vunpack.c.l.b16 %v141
    %v525 = vunpack.c.h.b16 %v141
    %v526 = vunpack.c.l.b16 %v142
    %v527 = vunpack.c.h.b16 %v142
    %v528 = vunpack.c.l.b16 %v143
    %v529 = vunpack.c.h.b16 %v143
    %v530 = vunpack.c.l.b16 %v144
    %v531 = vunpack.c.h.b16 %v144
    %v532 = vunpack.c.l.b16 %v145
    %v533 = vunpack.c.h.b16 %v145
    %v534 = vunpack.c.l.b16 %v146
    %v535 = vunpack.c.h.b16 %v146
    %v536 = vunpack.c.l.b16 %v147
    %v537 = vunpack.c.h.b16 %v147
    %v538 = vunpack.c.l.b16 %v148
    %v539 = vunpack.c.h.b16 %v148
    %v540 = vunpack.c.l.b16 %v149
    %v541 = vunpack.c.h.b16 %v149
    %v542 = vunpack.c.l.b16 %v150
    %v543 = vunpack.c.h.b16 %v150
    %v544 = vunpack.c.l.b16 %v151
    %v545 = vunpack.c.h.b16 %v151
    %v546 = vunpack.c.l.b16 %v152
    %v547 = vunpack.c.h.b16 %v152
    %v548 = vunpack.c.l.b16 %v153
    %v549 = vunpack.c.h.b16 %v153
    %v550 = vunpack.c.l.b16 %v154
    %v551 = vunpack.c.h.b16 %v154
    %v552 = vunpack.c.l.b16 %v155
    %v553 = vunpack.c.h.b16 %v155
    %v554 = vunpack.c.l.b16 %v156
    %v555 = vunpack.c.h.b16 %v156
    %v556 = vunpack.c.l.b16 %v157
    %v557 = vunpack.c.h.b16 %v157
    %v558 = vunpack.c.l.b16 %v158
    %v559 = vunpack.c.h.b16 %v158
    %v560 = vunpack.c.l.b16 %v159
    %v561 = vunpack.c.h.b16 %v159
    %v562 = vunpack.c.l.b16 %v160
    %v563 = vunpack.c.h.b16 %v160
    %v564 = vunpack.c.l.b16 %v161
    %v565 = vunpack.c.h.b16 %v161
    %v566 = vunpack.c.l.b16 %v162
    %v567 = vunpack.c.h.b16 %v162
    %v568 = vunpack.c.l.b16 %v163
    %v569 = vunpack.c.h.b16 %v163
    %v570 = vunpack.c.l.b16 %v164
    %v571 = vunpack.c.h.b16 %v164
    %v572 = vunpack.c.l.b16 %v165
    %v573 = vunpack.c.h.b16 %v165
    %v574 = vunpack.c.l.b16 %v166
    %v575 = vunpack.c.h.b16 %v166
    %v576 = vunpack.c.l.b16 %v167
    %v577 = vunpack.c.h.b16 %v167
    %v578 = vunpack.c.l.b16 %v168
    %v579 = vunpack.c.h.b16 %v168
    %v580 = vunpack.c.l.b16 %v169
    %v581 = vunpack.c.h.b16 %v169
    %v582 = vunpack.c.l.b16 %v170
    %v583 = vunpack.c.h.b16 %v170
    %v584 = vunpack.c.l.b16 %v171
    %v585 = vunpack.c.h.b16 %v171
    %v586 = vunpack.c.l.b16 %v172
    %v587 = vunpack.c.h.b16 %v172
    %v588 = vunpack.c.l.b16 %v173
    %v589 = vunpack.c.h.b16 %v173
    %v590 = vunpack.c.l.b16 %v174
    %v591 = vunpack.c.h.b16 %v174
    %v592 = vunpack.c.l.b16 %v175
    %v593 = vunpack.c.h.b16 %v175
    %v594 = vunpack.c.l.b16 %v176
    %v595 = vunpack.c.h.b16 %v176
    %v596 = vunpack.c.l.b16 %v177
    %v597 = vunpack.c.h.b16 %v177
    %v598 = vunpack.c.l.b16 %v178
    %v599 = vunpack.c.h.b16 %v178
    %v600 = vunpack.c.l.b16 %v179
    %v601 = vunpack.c.h.b16 %v179
    %v602 = vunpack.c.l.b16 %v180
    %v603 = vunpack.c.h.b16 %v180
    %v604 = vunpack.c.l.b16 %v181
    %v605 = vunpack.c.h.b16 %v181
    %v606 = vunpack.c.l.b16 %v182
    %v607 = vunpack.c.h.b16 %v182
    %v608 = vunpack.c.l.b16 %v183
    %v609 = vunpack.c.h.b16 %v183
    %v610 = vpack.c.b16 %v362, %v354
    %v611 = vpack.c.b16 %v363, %v355
    %v612 = vpack.c.b16 %v364, %v356
    %v613 = vpack.c.b16 %v365, %v357
    %v614 = vpack.c.b16 %v366, %v358
    %v615 = vpack.c.b16 %v367, %v359
    %v616 = vpack.c.b16 %v368, %v360
    %v617 = vpack.c.b16 %v369, %v361
    %v618 = vpack.c.b16 %v378, %v370
    %v619 = vpack.c.b16 %v379, %v371
    %v620 = vpack.c.b16 %v380, %v372
    %v621 = vpack.c.b16 %v381, %v373
    %v622 = vpack.c.b16 %v382, %v374
    %v623 = vpack.c.b16 %v383, %v375
    %v624 = vpack.c.b16 %v384, %v376
    %v625 = vpack.c.b16 %v385, %v377
    %v626 = vpack.c.b16 %v394, %v386
    %v627 = vpack.c.b16 %v395, %v387
    %v628 = vpack.c.b16 %v396, %v388
    %v629 = vpack.c.b16 %v397, %v389
    %v630 = vpack.c.b16 %v398, %v390
    %v631 = vpack.c.b16 %v399, %v391
    %v632 = vpack.c.b16 %v400, %v392
    %v633 = vpack.c.b16 %v401, %v393
    %v634 = vpack.c.b16 %v410, %v402
    %v635 = vpack.c.b16 %v411, %v403
    %v636 = vpack.c.b16 %v412, %v404
    %v637 = vpack.c.b16 %v413, %v405
    %v638 = vpack.c.b16 %v414, %v406
    %v639 = vpack.c.b16 %v415, %v407
    %v640 = vpack.c.b16 %v416, %v408
    %v641 = vpack.c.b16 %v417, %v409
    %v642 = vpack.c.b16 %v426, %v418
    %v643 = vpack.c.b16 %v427, %v419
    %v644 = vpack.c.b16 %v428, %v420
    %v645 = vpack.c.b16 %v429, %v421
    %v646 = vpack.c.b16 %v430, %v422
    %v647 = vpack.c.b16 %v431, %v423
    %v648 = vpack.c.b16 %v432, %v424
    %v649 = vpack.c.b16 %v433, %v425
    %v650 = vpack.c.b16 %v442, %v434
    %v651 = vpack.c.b16 %v443, %v435
    %v652 = vpack.c.b16 %v444, %v436
    %v653 = vpack.c.b16 %v445, %v437
    %v654 = vpack.c.b16 %v446, %v438
    %v655 = vpack.c.b16 %v447, %v439
    %v656 = vpack.c.b16 %v448, %v440
    %v657 = vpack.c.b16 %v449, %v441
    %v658 = vpack.c.b16 %v458, %v450
    %v659 = vpack.c.b16 %v459, %v451
    %v660 = vpack.c.b16 %v460, %v452
    %v661 = vpack.c.b16 %v461, %v453
    %v662 = vpack.c.b16 %v462, %v454
    %v663 = vpack.c.b16 %v463, %v455
    %v664 = vpack.c.b16 %v464, %v456
    %v665 = vpack.c.b16 %v465, %v457
    %v666 = vpack.c.b16 %v474, %v466
    %v667 = vpack.c.b16 %v475, %v467
    %v668 = vpack.c.b16 %v476, %v468
    %v669 = vpack.c.b16 %v477, %v469
    %v670 = vpack.c.b16 %v478, %v470
    %v671 = vpack.c.b16 %v479, %v471
    %v672 = vpack.c.b16 %v480, %v472
    %v673 = vpack.c.b16 %v481, %v473
    %v674 = vpack.c.b16 %v490, %v482
    %v675 = vpack.c.b16 %v491, %v483
    %v676 = vpack.c.b16 %v492, %v484
    %v677 = vpack.c.b16 %v493, %v485
    %v678 = vpack.c.b16 %v494, %v486
    %v679 = vpack.c.b16 %v495, %v487
    %v680 = vpack.c.b16 %v496, %v488
    %v681 = vpack.c.b16 %v497, %v489
    %v682 = vpack.c.b16 %v506, %v498
    %v683 = vpack.c.b16 %v507, %v499
    %v684 = vpack.c.b16 %v508, %v500
    %v685 = vpack.c.b16 %v509, %v501
    %v686 = vpack.c.b16 %v510, %v502
    %v687 = vpack.c.b16 %v511, %v503
    %v688 = vpack.c.b16 %v512, %v504
    %v689 = vpack.c.b16 %v513, %v505
    %v690 = vpack.c.b16 %v522, %v514
    %v691 = vpack.c.b16 %v523, %v515
    %v692 = vpack.c.b16 %v524, %v516
    %v693 = vpack.c.b16 %v525, %v517
    %v694 = vpack.c.b16 %v526, %v518
    %v695 = vpack.c.b16 %v527, %v519
    %v696 = vpack.c.b16 %v528, %v520
    %v697 = vpack.c.b16 %v529, %v521
    %v698 = vpack.c.b16 %v538, %v530
    %v699 = vpack.c.b16 %v539, %v531
    %v700 = vpack.c.b16 %v540, %v532
    %v701 = vpack.c.b16 %v541, %v533
    %v702 = vpack.c.b16 %v542, %v534
    %v703 = vpack.c.b16 %v543, %v535
    %v704 = vpack.c.b16 %v544, %v536
    %v705 = vpack.c.b16 %v545, %v537
    %v706 = vpack.c.b16 %v554, %v546
    %v707 = vpack.c.b16 %v555, %v547
    %v708 = vpack.c.b16 %v556, %v548
    %v709 = vpack.c.b16 %v557, %v549
    %v710 = vpack.c.b16 %v558, %v550
    %v711 = vpack.c.b16 %v559, %v551
    %v712 = vpack.c.b16 %v560, %v552
    %v713 = vpack.c.b16 %v561, %v553
    %v714 = vpack.c.b16 %v570, %v562
    %v715 = vpack.c.b16 %v571, %v563
    %v716 = vpack.c.b16 %v572, %v564
    %v717 = vpack.c.b16 %v573, %v565
    %v718 = vpack.c.b16 %v574, %v566
    %v719 = vpack.c.b16 %v575, %v567
    %v720 = vpack.c.b16 %v576, %v568
    %v721 = vpack.c.b16 %v577, %v569
    %v722 = vpack.c.b16 %v586, %v578
    %v723 = vpack.c.b16 %v587, %v579
    %v724 = vpack.c.b16 %v588, %v580
    %v725 = vpack.c.b16 %v589, %v581
    %v726 = vpack.c.b16 %v590, %v582
    %v727 = vpack.c.b16 %v591, %v583
    %v728 = vpack.c.b16 %v592, %v584
    %v729 = vpack.c.b16 %v593, %v585
    %v730 = vpack.c.b16 %v602, %v594
    %v731 = vpack.c.b16 %v603, %v595
    %v732 = vpack.c.b16 %v604, %v596
    %v733 = vpack.c.b16 %v605, %v597
    %v734 = vpack.c.b16 %v606, %v598
    %v735 = vpack.c.b16 %v607, %v599
    %v736 = vpack.c.b16 %v608, %v600
    %v737 = vpack.c.b16 %v609, %v601
    %866 = vmatprep.subr.bf16.mxu0 %v667
    %867 = vmatpush1.bf16.msra.mxu0 %v666
    %868 = vmatprep.subr.bf16.mxu0 %v659
    %869 = vmatpush1.bf16.msra.mxu0 %v658
    %870 = vmatprep.subr.bf16.mxu0 %v651
    %871 = vmatpush1.bf16.msra.mxu0 %v650
    %872 = vmatprep.subr.bf16.mxu0 %v643
    %873 = vmatpush1.bf16.msra.mxu0 %v642
    %874 = vmatprep.subr.bf16.mxu0 %v635
    %875 = vmatpush1.bf16.msra.mxu0 %v634
    %876 = vmatprep.subr.bf16.mxu0 %v627
    %877 = vmatpush1.bf16.msra.mxu0 %v626
    %878 = vmatprep.subr.bf16.mxu0 %v619
    %879 = vmatpush1.bf16.msra.mxu0 %v618
    %880 = vmatprep.subr.bf16.mxu0 %v611
    %881 = vmatpush1.bf16.msra.mxu0 %v610
    %882 = vmatprep.subr.bf16.mxu0 %v731
    %883 = vmatpush2.bf16.msra.mxu0 %v730
    %884 = vmatprep.subr.bf16.mxu0 %v723
    %885 = vmatpush2.bf16.msra.mxu0 %v722
    %886 = vmatprep.subr.bf16.mxu0 %v715
    %887 = vmatpush2.bf16.msra.mxu0 %v714
    %888 = vmatprep.subr.bf16.mxu0 %v707
    %889 = vmatpush2.bf16.msra.mxu0 %v706
    %890 = vmatprep.subr.bf16.mxu0 %v699
    %891 = vmatpush2.bf16.msra.mxu0 %v698
    %892 = vmatprep.subr.bf16.mxu0 %v691
    %893 = vmatpush2.bf16.msra.mxu0 %v690
    %894 = vmatprep.subr.bf16.mxu0 %v683
    %895 = vmatpush2.bf16.msra.mxu0 %v682
    %896 = vmatprep.subr.bf16.mxu0 %v675
    %897 = vmatpush2.bf16.msra.mxu0 %v674
    %898 = vmatprep.mubr.bf16.mxu0 %v55
    %899 = vmatmul.mubr.bf16.gmra.mxu0 %v54
    %v900 = vpop.f32.mrf.mxu0
    %v901 = vadd.f32 %v189, %v900
    %v902 = vpop.f32.mrf.mxu0
    %v903 = vadd.f32 %v193, %v902
    %v904 = vpop.f32.mrf.mxu0
    %v905 = vpop.f32.mrf.mxu0
    %906 = vdwg.mxu0
    %907 = vmatprep.subr.bf16.mxu0 %v669
    %908 = vmatpush1.bf16.msra.mxu0 %v668
    %909 = vmatprep.subr.bf16.mxu0 %v661
    %910 = vmatpush1.bf16.msra.mxu0 %v660
    %911 = vmatprep.subr.bf16.mxu0 %v653
    %912 = vmatpush1.bf16.msra.mxu0 %v652
    %913 = vmatprep.subr.bf16.mxu0 %v645
    %914 = vmatpush1.bf16.msra.mxu0 %v644
    %915 = vmatprep.subr.bf16.mxu0 %v637
    %916 = vmatpush1.bf16.msra.mxu0 %v636
    %917 = vmatprep.subr.bf16.mxu0 %v629
    %918 = vmatpush1.bf16.msra.mxu0 %v628
    %919 = vmatprep.subr.bf16.mxu0 %v621
    %920 = vmatpush1.bf16.msra.mxu0 %v620
    %921 = vmatprep.subr.bf16.mxu0 %v613
    %922 = vmatpush1.bf16.msra.mxu0 %v612
    %923 = vmatprep.subr.bf16.mxu0 %v733
    %924 = vmatpush2.bf16.msra.mxu0 %v732
    %925 = vmatprep.subr.bf16.mxu0 %v725
    %926 = vmatpush2.bf16.msra.mxu0 %v724
    %927 = vmatprep.subr.bf16.mxu0 %v717
    %928 = vmatpush2.bf16.msra.mxu0 %v716
    %929 = vmatprep.subr.bf16.mxu0 %v709
    %930 = vmatpush2.bf16.msra.mxu0 %v708
    %931 = vmatprep.subr.bf16.mxu0 %v701
    %932 = vmatpush2.bf16.msra.mxu0 %v700
    %933 = vmatprep.subr.bf16.mxu0 %v693
    %934 = vmatpush2.bf16.msra.mxu0 %v692
    %935 = vmatprep.subr.bf16.mxu0 %v685
    %936 = vmatpush2.bf16.msra.mxu0 %v684
    %937 = vmatprep.subr.bf16.mxu0 %v677
    %938 = vmatpush2.bf16.msra.mxu0 %v676
    %939 = vmatprep.mubr.bf16.mxu0 %v55
    %940 = vmatmul.mubr.bf16.gmra.mxu0 %v54
    %v941 = vpop.f32.mrf.mxu0
    %v942 = vadd.f32 %v197, %v941
    %v943 = vpop.f32.mrf.mxu0
    %v944 = vadd.f32 %v201, %v943
    %v945 = vpop.f32.mrf.mxu0
    %v946 = vpop.f32.mrf.mxu0
    %947 = vdwg.mxu0
    %948 = vmatprep.subr.bf16.mxu0 %v671
    %949 = vmatpush1.bf16.msra.mxu0 %v670
    %950 = vmatprep.subr.bf16.mxu0 %v663
    %951 = vmatpush1.bf16.msra.mxu0 %v662
    %952 = vmatprep.subr.bf16.mxu0 %v655
    %953 = vmatpush1.bf16.msra.mxu0 %v654
    %954 = vmatprep.subr.bf16.mxu0 %v647
    %955 = vmatpush1.bf16.msra.mxu0 %v646
    %956 = vmatprep.subr.bf16.mxu0 %v639
    %957 = vmatpush1.bf16.msra.mxu0 %v638
    %958 = vmatprep.subr.bf16.mxu0 %v631
    %959 = vmatpush1.bf16.msra.mxu0 %v630
    %960 = vmatprep.subr.bf16.mxu0 %v623
    %961 = vmatpush1.bf16.msra.mxu0 %v622
    %962 = vmatprep.subr.bf16.mxu0 %v615
    %963 = vmatpush1.bf16.msra.mxu0 %v614
    %964 = vmatprep.subr.bf16.mxu0 %v735
    %965 = vmatpush2.bf16.msra.mxu0 %v734
    %966 = vmatprep.subr.bf16.mxu0 %v727
    %967 = vmatpush2.bf16.msra.mxu0 %v726
    %968 = vmatprep.subr.bf16.mxu0 %v719
    %969 = vmatpush2.bf16.msra.mxu0 %v718
    %970 = vmatprep.subr.bf16.mxu0 %v711
    %971 = vmatpush2.bf16.msra.mxu0 %v710
    %972 = vmatprep.subr.bf16.mxu0 %v703
    %973 = vmatpush2.bf16.msra.mxu0 %v702
    %974 = vmatprep.subr.bf16.mxu0 %v695
    %975 = vmatpush2.bf16.msra.mxu0 %v694
    %976 = vmatprep.subr.bf16.mxu0 %v687
    %977 = vmatpush2.bf16.msra.mxu0 %v686
    %978 = vmatprep.subr.bf16.mxu0 %v679
    %979 = vmatpush2.bf16.msra.mxu0 %v678
    %980 = vmatprep.mubr.bf16.mxu0 %v55
    %981 = vmatmul.mubr.bf16.gmra.mxu0 %v54
    %v982 = vpop.f32.mrf.mxu0
    %v983 = vadd.f32 %v205, %v982
    %v984 = vpop.f32.mrf.mxu0
    %v985 = vadd.f32 %v209, %v984
    %v986 = vpop.f32.mrf.mxu0
    %v987 = vpop.f32.mrf.mxu0
    %988 = vdwg.mxu0
    %989 = vmatprep.subr.bf16.mxu0 %v673
    %990 = vmatpush1.bf16.msra.mxu0 %v672
    %991 = vmatprep.subr.bf16.mxu0 %v665
    %992 = vmatpush1.bf16.msra.mxu0 %v664
    %993 = vmatprep.subr.bf16.mxu0 %v657
    %994 = vmatpush1.bf16.msra.mxu0 %v656
    %995 = vmatprep.subr.bf16.mxu0 %v649
    %996 = vmatpush1.bf16.msra.mxu0 %v648
    %997 = vmatprep.subr.bf16.mxu0 %v641
    %998 = vmatpush1.bf16.msra.mxu0 %v640
    %999 = vmatprep.subr.bf16.mxu0 %v633
    %1000 = vmatpush1.bf16.msra.mxu0 %v632
    %1001 = vmatprep.subr.bf16.mxu0 %v625
    %1002 = vmatpush1.bf16.msra.mxu0 %v624
    %1003 = vmatprep.subr.bf16.mxu0 %v617
    %1004 = vmatpush1.bf16.msra.mxu0 %v616
    %1005 = vmatprep.subr.bf16.mxu0 %v737
    %1006 = vmatpush2.bf16.msra.mxu0 %v736
    %1007 = vmatprep.subr.bf16.mxu0 %v729
    %1008 = vmatpush2.bf16.msra.mxu0 %v728
    %1009 = vmatprep.subr.bf16.mxu0 %v721
    %1010 = vmatpush2.bf16.msra.mxu0 %v720
    %1011 = vmatprep.subr.bf16.mxu0 %v713
    %1012 = vmatpush2.bf16.msra.mxu0 %v712
    %1013 = vmatprep.subr.bf16.mxu0 %v705
    %1014 = vmatpush2.bf16.msra.mxu0 %v704
    %1015 = vmatprep.subr.bf16.mxu0 %v697
    %1016 = vmatpush2.bf16.msra.mxu0 %v696
    %1017 = vmatprep.subr.bf16.mxu0 %v689
    %1018 = vmatpush2.bf16.msra.mxu0 %v688
    %1019 = vmatprep.subr.bf16.mxu0 %v681
    %1020 = vmatpush2.bf16.msra.mxu0 %v680
    %1021 = vmatprep.mubr.bf16.mxu0 %v55
    %1022 = vmatmul.mubr.bf16.gmra.mxu0 %v54
    %v1023 = vpop.f32.mrf.mxu0
    %v1024 = vadd.f32 %v213, %v1023
    %v1025 = vpop.f32.mrf.mxu0
    %v1026 = vadd.f32 %v217, %v1025
    %v1027 = vpop.f32.mrf.mxu0
    %v1028 = vpop.f32.mrf.mxu0
    %1029 = vdwg.mxu0
    %1030 = vst [vmem:[#allocation8] sm:$0xff] %v901
    %1031 = vst [vmem:[#allocation8 + $0x8] sm:$0xff] %v903
    %1032 = vst [vmem:[#allocation8 + $0x10] sm:$0xff] %v942
    %1033 = vst [vmem:[#allocation8 + $0x18] sm:$0xff] %v944
    %1034 = vst [vmem:[#allocation8 + $0x20] sm:$0xff] %v983
    %1035 = vst [vmem:[#allocation8 + $0x28] sm:$0xff] %v985
    %1036 = vst [vmem:[#allocation8 + $0x30] sm:$0xff] %v1024
    %1037 = vst [vmem:[#allocation8 + $0x38] sm:$0xff] %v1026
    // Predicated region
    $region26: #{tpu_custom_call.1} parent=1 // pred_check
      _
    $region27: #{tpu_custom_call.1} parent=1 // pred_check_branch
      %1039 = sbr.rel (0) target = $region29
    $region28: #{tpu_custom_call.1} parent=1 // pred_region
      %s1041 = ssub.s32 1024, 1024
      %1042 = vsyncadd [#allocation4], %s1041
      %s1044 = sshll.u32 [#allocation8], 4
      %s1045 = int_to_ptr.vmem [resolvable:$true] %s1044
      %1047 = dma.vmem_to_hbm [thread:$0]  %s1045, 1024, %s3, [#allocation4]
    $region29: #{tpu_custom_call.1} parent=1 // pred_fallthru
      _
    // Predicated region
    $region30: #{tpu_custom_call.1} parent=1 // pred_check
      _
    $region31: #{tpu_custom_call.1} parent=1 // pred_check_branch
      %1049 = sbr.rel (0) target = $region33
    $region32: #{tpu_custom_call.1} parent=1 // pred_region
      %1050 = dma.done [#allocation4], 1024
    $region33: #{tpu_custom_call.1} parent=1 // pred_fallthru
      _
    %1051 = vsyncpa [#allocation3], 1
    %1052 = vsyncpa [#allocation6], 1
    %1053 = vsyncpa [#allocation4], 1

</llo_original>
